<compile_context>
chip_gen: v6e
topology: v6e:2x2x1
jax: 0.10.0
libtpu: 0.0.40
codegen_flags: <defaults>
</compile_context>

<pallas_src>
import numpy as np
import jax
import jax.numpy as jnp
from jax.experimental import pallas as pl
from jax.experimental.pallas import tpu as pltpu


# ----------------------------------------------------------------------------
# Glue: bilinear-interpolation matrix matching
# F.interpolate(mode='bilinear', align_corners=False)
# ----------------------------------------------------------------------------
def _bilinear_matrix(out_size: int, in_size: int) -> np.ndarray:
    scale = in_size / out_size
    dst = np.arange(out_size, dtype=np.float64)
    src = (dst + 0.5) * scale - 0.5
    src = np.maximum(src, 0.0)                          # PyTorch clamps negatives to 0
    i0 = np.minimum(np.floor(src).astype(np.int64), in_size - 1)
    i1 = np.minimum(i0 + 1, in_size - 1)
    lam1 = src - i0
    lam0 = 1.0 - lam1
    M = np.zeros((out_size, in_size), dtype=np.float64)
    np.add.at(M, (np.arange(out_size), i0), lam0)
    np.add.at(M, (np.arange(out_size), i1), lam1)
    return M.astype(np.float32)


# ----------------------------------------------------------------------------
# Glue: im2col for 3x3 stride-2 pad-1 conv, NCHW in -> (N, 9*Cin, Ho*Wo)
# (spatial flattened on the minor axis so it lands on TPU lanes)
# ----------------------------------------------------------------------------
def _im2col_3x3_s2_nchw(x):
    N, C, H, W = x.shape
    Ho = (H + 2 - 3) // 2 + 1
    Wo = (W + 2 - 3) // 2 + 1
    xp = jnp.pad(x, ((0, 0), (0, 0), (1, 1), (1, 1)))
    taps = []
    for kh in range(3):
        for kw in range(3):
            taps.append(xp[:, :, kh:kh + 2 * (Ho - 1) + 1:2,
                           kw:kw + 2 * (Wo - 1) + 1:2])
    p = jnp.stack(taps, axis=1)                         # (N, 9, Cin, Ho, Wo)
    return p.reshape(N, 9 * C, Ho * Wo), Ho, Wo


# ----------------------------------------------------------------------------
# Tile / VMEM sizing helpers
# ----------------------------------------------------------------------------
def _pick_tile(extent: int, align: int, target: int) -> int:
    """Tile for one dimension.

    Returns either the full extent (if small), the largest `align`-multiple
    divisor of `extent` that is <= target, or (if no aligned divisor exists)
    an aligned tile used with a pl.cdiv grid and a ragged/masked last block.
    """
    if extent <= target:
        return extent
    t = max(align, (target // align) * align)
    d = t
    while d >= align:
        if extent % d == 0:
            return d
        d -= align
    return t                       # ragged last block handled by pl.cdiv grid


def _vmem_cap_bytes() -> int:
    """~85% of per-core VMEM; conservative 64 MiB assumption if unknown."""
    try:
        cap = int(pltpu.get_tpu_info().vmem_capacity_bytes)
    except Exception:
        cap = 64 << 20
    return max(32 << 20, int(0.85 * cap))


def _vmem_limit_bytes(blocks, extra_f32_elems=0) -> int:
    """blocks: [(block_shape, dtype)] (double-buffered) + in-kernel f32 temps."""
    need = 0
    for shape, dt in blocks:
        need += 2 * int(np.prod(shape)) * jnp.dtype(dt).itemsize
    need += 4 * int(extra_f32_elems)
    need = 2 * need + (8 << 20)            # compiler-scratch headroom
    return int(min(max(need, 32 << 20), _vmem_cap_bytes()))


# ----------------------------------------------------------------------------
# Pallas kernels
# ----------------------------------------------------------------------------
def _conv_cls_kernel(p_ref, wb_ref, bb_ref, wc_ref, bc_ref, o_ref):
    # p_ref : (1, K, TM)   im2col patches, spatial on lanes (bf16)
    # wb_ref: (C1, K) bf16 ; bb_ref: (C1, 1) f32
    # wc_ref: (ncls, C1) bf16 ; bc_ref: (ncls, 1) f32
    # o_ref : (1, ncls, TM) low-resolution logits (bf16)
    feat = jnp.dot(wb_ref[...], p_ref[0], preferred_element_type=jnp.float32)
    feat = jnp.maximum(feat + bb_ref[...], 0.0)            # bias + ReLU in f32 (VPU)
    logits = jnp.dot(wc_ref[...], feat.astype(wc_ref.dtype),
                     preferred_element_type=jnp.float32)
    o_ref[0] = (logits + bc_ref[...]).astype(o_ref.dtype)


def _upsample_w_kernel(lg_ref, rwT_ref, o_ref):
    # lg_ref : (1, TR, Wo)  rows = (class, Ho) folded, lanes = Wo
    # rwT_ref: (Wo, TW)     bilinear weights along W (transposed), column tile
    # o_ref  : (1, TR, TW)
    o_ref[0] = jnp.dot(lg_ref[0], rwT_ref[...],
                       preferred_element_type=jnp.float32).astype(o_ref.dtype)


def _upsample_h_kernel(rh_ref, t_ref, o_ref):
    # rh_ref: (TH, Ho)   bilinear weights for this tile of output rows
    # t_ref : (1, 1, Ho, TW)  W-upsampled logits for this (image, class, col tile)
    # o_ref : (1, 1, TH, TW)
    o_ref[0, 0] = jnp.dot(rh_ref[...], t_ref[0, 0],
                          preferred_element_type=jnp.float32).astype(o_ref.dtype)


# ----------------------------------------------------------------------------
# Wrapper = _SimpleSegmentationModel.forward
# ----------------------------------------------------------------------------
def simple_segmentation_model(x_nchw, params, *, compute_dtype=jnp.bfloat16,
                              out_dtype=jnp.float32):
    N, Cin, H, W = x_nchw.shape

    # ---- backbone: conv3x3 s2 p1 as im2col matmul (patches stored in bf16) --
    x = x_nchw.astype(compute_dtype)                     # cast BEFORE im2col
    patches, Ho, Wo = _im2col_3x3_s2_nchw(x)             # (N, K, M), spatial on lanes
    M = Ho * Wo
    K = patches.shape[1]

    wb = jnp.transpose(params["backbone_w"], (0, 2, 3, 1)).reshape(-1, K)
    wb = wb.astype(compute_dtype)                        # (C1, K)
    C1 = wb.shape[0]
    bb = params["backbone_b"].reshape(C1, 1).astype(jnp.float32)
    wc = params["classifier_w"].reshape(-1, C1).astype(compute_dtype)  # (ncls, C1)
    ncls = wc.shape[0]
    bc = params["classifier_b"].reshape(ncls, 1).astype(jnp.float32)

    # Spatial tile: as large as a ~4 MiB patch block allows (amortize per-step
    # overhead on v5e/v6e; still VMEM-safe on v7x via the cap below).
    tm_target = max(128, min(8192, ((4 << 20) // max(1, 2 * K)) // 128 * 128))
    tm = _pick_tile(M, 128, tm_target)

    blocks1 = [((1, K, tm), compute_dtype), ((C1, K), compute_dtype),
               ((C1, 1), jnp.float32), ((ncls, C1), compute_dtype),
               ((ncls, 1), jnp.float32), ((1, ncls, tm), compute_dtype)]
    extra1 = (C1 + ncls) * tm                            # in-kernel f32 feat/logits
    logits = pl.pallas_call(
        _conv_cls_kernel,
        out_shape=jax.ShapeDtypeStruct((N, ncls, M), compute_dtype),
        grid=(N, pl.cdiv(M, tm)),
        in_specs=[
            pl.BlockSpec((1, K, tm), lambda n, m: (n, 0, m)),
            pl.BlockSpec((C1, K), lambda n, m: (0, 0)),
            pl.BlockSpec((C1, 1), lambda n, m: (0, 0)),
            pl.BlockSpec((ncls, C1), lambda n, m: (0, 0)),
            pl.BlockSpec((ncls, 1), lambda n, m: (0, 0)),
        ],
        out_specs=pl.BlockSpec((1, ncls, tm), lambda n, m: (n, 0, m)),
        compiler_params=pltpu.CompilerParams(
            dimension_semantics=("parallel", "parallel"),
            vmem_limit_bytes=_vmem_limit_bytes(blocks1, extra1)),
    )(patches, wb, bb, wc, bc)

    # ---- head: separable bilinear upsample (align_corners=False) ------------
    rh = jnp.asarray(_bilinear_matrix(H, Ho)).astype(compute_dtype)     # (H, Ho)
    rwT = jnp.asarray(_bilinear_matrix(W, Wo)).T.astype(compute_dtype)  # (Wo, W)

    # Pass 1: W axis, computed once per image. Classes folded into the sublane
    # (row) axis -> one dense 2-D matmul, no broadcast_to / batched einsum.
    R = ncls * Ho
    lg = logits.reshape(N, R, Wo)
    tr = _pick_tile(R, 8, 1024)
    tw = _pick_tile(W, 128, 2048)
    blocks2 = [((1, tr, Wo), compute_dtype), ((Wo, tw), compute_dtype),
               ((1, tr, tw), compute_dtype)]
    tmp = pl.pallas_call(
        _upsample_w_kernel,
        out_shape=jax.ShapeDtypeStruct((N, R, W), compute_dtype),
        grid=(N, pl.cdiv(R, tr), pl.cdiv(W, tw)),
        in_specs=[
            pl.BlockSpec((1, tr, Wo), lambda n, r, w: (n, r, 0)),
            pl.BlockSpec((Wo, tw), lambda n, r, w: (0, w)),
        ],
        out_specs=pl.BlockSpec((1, tr, tw), lambda n, r, w: (n, r, w)),
        compiler_params=pltpu.CompilerParams(
            dimension_semantics=("parallel", "parallel", "parallel"),
            vmem_limit_bytes=_vmem_limit_bytes(blocks2, tr * tw)),
    )(lg, rwT)
    tmp = tmp.reshape(N, ncls, Ho, W)                    # free (contiguous) reshape

    # Pass 2: H axis, tiled over (image, class, row tile, col tile).
    # TODO(synk): band the Ho read per row tile (only ~TH*Ho/H + 2 source rows
    # are referenced) to remove the remaining redundant reads of `tmp`.
    # TODO(synk): for W not a multiple of 128, flatten the output to
    # (N, ncls, H*W) and tile the last dim in 128s for fully lane-dense stores.
    th = _pick_tile(H, 8, 512)
    blocks3 = [((th, Ho), compute_dtype), ((1, 1, Ho, tw), compute_dtype),
               ((1, 1, th, tw), out_dtype)]
    out = pl.pallas_call(
        _upsample_h_kernel,
        out_shape=jax.ShapeDtypeStruct((N, ncls, H, W), out_dtype),
        grid=(N, ncls, pl.cdiv(H, th), pl.cdiv(W, tw)),
        in_specs=[
            pl.BlockSpec((th, Ho), lambda n, c, h, w: (h, 0)),
            pl.BlockSpec((1, 1, Ho, tw), lambda n, c, h, w: (n, c, 0, w)),
        ],
        out_specs=pl.BlockSpec((1, 1, th, tw), lambda n, c, h, w: (n, c, h, w)),
        compiler_params=pltpu.CompilerParams(
            dimension_semantics=("parallel", "parallel", "parallel", "parallel"),
            vmem_limit_bytes=_vmem_limit_bytes(blocks3, th * tw)),
    )(rh, tmp)

    # aux_classifier is None in this instantiation -> result only has 'out'.
    return {"out": out}


# ----------------------------------------------------------------------------
if __name__ == "__main__":
    key = jax.random.PRNGKey(0)
    k1, k2, k3, k4, k5 = jax.random.split(key, 5)

    N, Cin, H, W = 2, 4, 16, 16
    C1, ncls = 8, 5

    x = jax.random.normal(k1, (N, Cin, H, W), jnp.float32)
    params = {
        "backbone_w": 0.1 * jax.random.normal(k2, (C1, Cin, 3, 3), jnp.float32),
        "backbone_b": 0.1 * jax.random.normal(k3, (C1,), jnp.float32),
        "classifier_w": 0.1 * jax.random.normal(k4, (ncls, C1, 1, 1), jnp.float32),
        "classifier_b": 0.1 * jax.random.normal(k5, (ncls,), jnp.float32),
    }

    result = jax.jit(simple_segmentation_model)(x, params)
    out = jax.block_until_ready(result["out"])
    assert out.shape == (N, ncls, H, W), out.shape

    # pure-JAX fp32 reference of the same forward pass (independent of im2col)
    feat_ref = jax.lax.conv_general_dilated(
        x, params["backbone_w"], window_strides=(2, 2),
        padding=((1, 1), (1, 1)),
        dimension_numbers=("NCHW", "OIHW", "NCHW"))
    feat_ref = jnp.maximum(feat_ref + params["backbone_b"][None, :, None, None], 0.0)
    logits_ref = (jnp.einsum("nchw,kc->nkhw", feat_ref,
                             params["classifier_w"].reshape(ncls, C1))
                  + params["classifier_b"][None, :, None, None])
    Ho, Wo = feat_ref.shape[2], feat_ref.shape[3]
    Rh = jnp.asarray(_bilinear_matrix(H, Ho))
    Rw = jnp.asarray(_bilinear_matrix(W, Wo))
    up_ref = jnp.einsum("Ah,Bw,nchw->ncAB", Rh, Rw, logits_ref)

    # bf16 matmul inputs with fp32 accumulation -> loosened tolerance
    np.testing.assert_allclose(np.asarray(out), np.asarray(up_ref),
                               rtol=3e-2, atol=3e-2)

    print("KERNEL_OK")
</pallas_src>

<mosaic_0001>
module attributes {stable_mosaic.version = 11 : i64} {
  func.func @_upsample_w_kernel(%arg0: i32, %arg1: i32, %arg2: i32, %arg3: memref<1x40x8xbf16, #tpu.memory_space<vmem>>, %arg4: memref<8x16xbf16, #tpu.memory_space<vmem>>, %arg5: memref<1x40x16xbf16, #tpu.memory_space<vmem>>) attributes {dimension_semantics = [#tpu.dimension_semantics<parallel>, #tpu.dimension_semantics<parallel>, #tpu.dimension_semantics<parallel>], iteration_bounds = array<i64: 2, 1, 1>, scalar_prefetch = 0 : i64, scratch_operands = 0 : i64, tpu.core_type = #tpu.core_type<tc>, window_params = [{transform_indices = @transform_0, window_bounds = array<i64: 1, 40, 8>}, {transform_indices = @transform_1, window_bounds = array<i64: 8, 16>}, {transform_indices = @transform_2, window_bounds = array<i64: 1, 40, 16>}]} {
    %c0 = arith.constant 0 : index
    %c0_0 = arith.constant 0 : index
    %c0_1 = arith.constant 0 : index
    %0 = vector.load %arg3[%c0, %c0_0, %c0_1] : memref<1x40x8xbf16, #tpu.memory_space<vmem>>, vector<1x40x8xbf16>
    %1 = vector.shape_cast %0 : vector<1x40x8xbf16> to vector<40x8xbf16>
    %c0_2 = arith.constant 0 : index
    %c0_3 = arith.constant 0 : index
    %2 = vector.load %arg4[%c0_2, %c0_3] : memref<8x16xbf16, #tpu.memory_space<vmem>>, vector<8x16xbf16>
    %cst = arith.constant dense<0.000000e+00> : vector<40x16xf32>
    %3 = tpu.matmul %1, %2, %cst {dimension_numbers = #tpu.dot_dimension_numbers<[1], [0], [0], [1], [0, 0, 1, 1], [], []>} : vector<40x8xbf16>, vector<8x16xbf16>, vector<40x16xf32> -> vector<40x16xf32>
    %4 = arith.truncf %3 : vector<40x16xf32> to vector<40x16xbf16>
    %c0_4 = arith.constant 0 : index
    %c0_5 = arith.constant 0 : index
    %c0_6 = arith.constant 0 : index
    %5 = vector.load %arg5[%c0_4, %c0_5, %c0_6] : memref<1x40x16xbf16, #tpu.memory_space<vmem>>, vector<1x40x16xbf16>
    %6 = vector.shape_cast %5 : vector<1x40x16xbf16> to vector<40x16xbf16>
    %7 = vector.shape_cast %4 : vector<40x16xbf16> to vector<1x40x16xbf16>
    tpu.vector_store %arg5[%c0_4, %c0_5, %c0_6], %7 {strides = array<i32>} : memref<1x40x16xbf16, #tpu.memory_space<vmem>>, vector<1x40x16xbf16>,
    return
  }
  func.func @transform_0(%arg0: i32, %arg1: i32, %arg2: i32) -> (i32, i32, i32) {
    %c0_i32 = arith.constant 0 : i32
    %c0_i32_0 = arith.constant 0 : i32
    return %arg0, %arg1, %c0_i32 : i32, i32, i32
  }
  func.func @transform_1(%arg0: i32, %arg1: i32, %arg2: i32) -> (i32, i32) {
    %c0_i32 = arith.constant 0 : i32
    %c0_i32_0 = arith.constant 0 : i32
    return %c0_i32, %arg2 : i32, i32
  }
  func.func @transform_2(%arg0: i32, %arg1: i32, %arg2: i32) -> (i32, i32, i32) {
    %c0_i32 = arith.constant 0 : i32
    return %arg0, %arg1, %arg2 : i32, i32, i32
  }
}

module attributes {stable_mosaic.version = 11 : i64} {
  func.func @_upsample_h_kernel(%arg0: i32, %arg1: i32, %arg2: i32, %arg3: i32, %arg4: memref<16x8xbf16, #tpu.memory_space<vmem>>, %arg5: memref<1x1x8x16xbf16, #tpu.memory_space<vmem>>, %arg6: memref<1x1x16x16xf32, #tpu.memory_space<vmem>>) attributes {dimension_semantics = [#tpu.dimension_semantics<parallel>, #tpu.dimension_semantics<parallel>, #tpu.dimension_semantics<parallel>, #tpu.dimension_semantics<parallel>], iteration_bounds = array<i64: 2, 5, 1, 1>, scalar_prefetch = 0 : i64, scratch_operands = 0 : i64, tpu.core_type = #tpu.core_type<tc>, window_params = [{transform_indices = @transform_0, window_bounds = array<i64: 16, 8>}, {transform_indices = @transform_1, window_bounds = array<i64: 1, 1, 8, 16>}, {transform_indices = @transform_2, window_bounds = array<i64: 1, 1, 16, 16>}]} {
    %c0 = arith.constant 0 : index
    %c0_0 = arith.constant 0 : index
    %0 = vector.load %arg4[%c0, %c0_0] : memref<16x8xbf16, #tpu.memory_space<vmem>>, vector<16x8xbf16>
    %c0_1 = arith.constant 0 : index
    %c0_2 = arith.constant 0 : index
    %c0_3 = arith.constant 0 : index
    %c0_4 = arith.constant 0 : index
    %1 = vector.load %arg5[%c0_1, %c0_2, %c0_3, %c0_4] : memref<1x1x8x16xbf16, #tpu.memory_space<vmem>>, vector<1x1x8x16xbf16>
    %2 = vector.shape_cast %1 : vector<1x1x8x16xbf16> to vector<8x16xbf16>
    %cst = arith.constant dense<0.000000e+00> : vector<16x16xf32>
    %3 = tpu.matmul %0, %2, %cst {dimension_numbers = #tpu.dot_dimension_numbers<[1], [0], [0], [1], [0, 0, 1, 1], [], []>} : vector<16x8xbf16>, vector<8x16xbf16>, vector<16x16xf32> -> vector<16x16xf32>
    %c0_5 = arith.constant 0 : index
    %c0_6 = arith.constant 0 : index
    %c0_7 = arith.constant 0 : index
    %c0_8 = arith.constant 0 : index
    %4 = vector.load %arg6[%c0_5, %c0_6, %c0_7, %c0_8] : memref<1x1x16x16xf32, #tpu.memory_space<vmem>>, vector<1x1x16x16xf32>
    %5 = vector.shape_cast %4 : vector<1x1x16x16xf32> to vector<16x16xf32>
    %6 = vector.shape_cast %3 : vector<16x16xf32> to vector<1x1x16x16xf32>
    tpu.vector_store %arg6[%c0_5, %c0_6, %c0_7, %c0_8], %6 {strides = array<i32>} : memref<1x1x16x16xf32, #tpu.memory_space<vmem>>, vector<1x1x16x16xf32>,
    return
  }
  func.func @transform_0(%arg0: i32, %arg1: i32, %arg2: i32, %arg3: i32) -> (i32, i32) {
    %c0_i32 = arith.constant 0 : i32
    %c0_i32_0 = arith.constant 0 : i32
    return %arg2, %c0_i32 : i32, i32
  }
  func.func @transform_1(%arg0: i32, %arg1: i32, %arg2: i32, %arg3: i32) -> (i32, i32, i32, i32) {
    %c0_i32 = arith.constant 0 : i32
    %c0_i32_0 = arith.constant 0 : i32
    return %arg0, %arg1, %c0_i32, %arg3 : i32, i32, i32, i32
  }
  func.func @transform_2(%arg0: i32, %arg1: i32, %arg2: i32, %arg3: i32) -> (i32, i32, i32, i32) {
    %c0_i32 = arith.constant 0 : i32
    return %arg0, %arg1, %arg2, %arg3 : i32, i32, i32, i32
  }
}

module attributes {stable_mosaic.version = 11 : i64} {
  func.func @_conv_cls_kernel(%arg0: i32, %arg1: i32, %arg2: memref<1x36x64xbf16, #tpu.memory_space<vmem>>, %arg3: memref<8x36xbf16, #tpu.memory_space<vmem>>, %arg4: memref<8x1xf32, #tpu.memory_space<vmem>>, %arg5: memref<5x8xbf16, #tpu.memory_space<vmem>>, %arg6: memref<5x1xf32, #tpu.memory_space<vmem>>, %arg7: memref<1x5x64xbf16, #tpu.memory_space<vmem>>) attributes {dimension_semantics = [#tpu.dimension_semantics<parallel>, #tpu.dimension_semantics<parallel>], iteration_bounds = array<i64: 2, 1>, scalar_prefetch = 0 : i64, scratch_operands = 0 : i64, tpu.core_type = #tpu.core_type<tc>, window_params = [{transform_indices = @transform_0, window_bounds = array<i64: 1, 36, 64>}, {pipeline_mode = #tpu.pipeline_mode<synchronous>, transform_indices = @transform_1, window_bounds = array<i64: 8, 36>}, {pipeline_mode = #tpu.pipeline_mode<synchronous>, transform_indices = @transform_2, window_bounds = array<i64: 8, 1>}, {pipeline_mode = #tpu.pipeline_mode<synchronous>, transform_indices = @transform_3, window_bounds = array<i64: 5, 8>}, {pipeline_mode = #tpu.pipeline_mode<synchronous>, transform_indices = @transform_4, window_bounds = array<i64: 5, 1>}, {transform_indices = @transform_5, window_bounds = array<i64: 1, 5, 64>}]} {
    %c0 = arith.constant 0 : index
    %c0_0 = arith.constant 0 : index
    %0 = vector.load %arg3[%c0, %c0_0] : memref<8x36xbf16, #tpu.memory_space<vmem>>, vector<8x36xbf16>
    %c0_1 = arith.constant 0 : index
    %c0_2 = arith.constant 0 : index
    %c0_3 = arith.constant 0 : index
    %1 = vector.load %arg2[%c0_1, %c0_2, %c0_3] : memref<1x36x64xbf16, #tpu.memory_space<vmem>>, vector<1x36x64xbf16>
    %2 = vector.shape_cast %1 : vector<1x36x64xbf16> to vector<36x64xbf16>
    %cst = arith.constant dense<0.000000e+00> : vector<8x64xf32>
    %3 = tpu.matmul %0, %2, %cst {dimension_numbers = #tpu.dot_dimension_numbers<[1], [0], [0], [1], [0, 0, 1, 1], [], []>} : vector<8x36xbf16>, vector<36x64xbf16>, vector<8x64xf32> -> vector<8x64xf32>
    %c0_4 = arith.constant 0 : index
    %c0_5 = arith.constant 0 : index
    %4 = vector.load %arg4[%c0_4, %c0_5] : memref<8x1xf32, #tpu.memory_space<vmem>>, vector<8x1xf32>
    %5 = vector.broadcast %4 : vector<8x1xf32> to vector<8x64xf32>
    %6 = arith.addf %3, %5 : vector<8x64xf32>
    %cst_6 = arith.constant 0.000000e+00 : f32
    %7 = vector.broadcast %cst_6 : f32 to vector<8x64xf32>
    %8 = arith.maximumf %6, %7 : vector<8x64xf32>
    %c0_7 = arith.constant 0 : index
    %c0_8 = arith.constant 0 : index
    %9 = vector.load %arg5[%c0_7, %c0_8] : memref<5x8xbf16, #tpu.memory_space<vmem>>, vector<5x8xbf16>
    %10 = arith.truncf %8 : vector<8x64xf32> to vector<8x64xbf16>
    %cst_9 = arith.constant dense<0.000000e+00> : vector<5x64xf32>
    %11 = tpu.matmul %9, %10, %cst_9 {dimension_numbers = #tpu.dot_dimension_numbers<[1], [0], [0], [1], [0, 0, 1, 1], [], []>} : vector<5x8xbf16>, vector<8x64xbf16>, vector<5x64xf32> -> vector<5x64xf32>
    %c0_10 = arith.constant 0 : index
    %c0_11 = arith.constant 0 : index
    %12 = vector.load %arg6[%c0_10, %c0_11] : memref<5x1xf32, #tpu.memory_space<vmem>>, vector<5x1xf32>
    %13 = vector.broadcast %12 : vector<5x1xf32> to vector<5x64xf32>
    %14 = arith.addf %11, %13 : vector<5x64xf32>
    %15 = arith.truncf %14 : vector<5x64xf32> to vector<5x64xbf16>
    %c0_12 = arith.constant 0 : index
    %c0_13 = arith.constant 0 : index
    %c0_14 = arith.constant 0 : index
    %16 = vector.load %arg7[%c0_12, %c0_13, %c0_14] : memref<1x5x64xbf16, #tpu.memory_space<vmem>>, vector<1x5x64xbf16>
    %17 = vector.shape_cast %16 : vector<1x5x64xbf16> to vector<5x64xbf16>
    %18 = vector.shape_cast %15 : vector<5x64xbf16> to vector<1x5x64xbf16>
    tpu.vector_store %arg7[%c0_12, %c0_13, %c0_14], %18 {strides = array<i32>} : memref<1x5x64xbf16, #tpu.memory_space<vmem>>, vector<1x5x64xbf16>,
    return
  }
  func.func @transform_0(%arg0: i32, %arg1: i32) -> (i32, i32, i32) {
    %c0_i32 = arith.constant 0 : i32
    %c0_i32_0 = arith.constant 0 : i32
    return %arg0, %c0_i32, %arg1 : i32, i32, i32
  }
  func.func @transform_1(%arg0: i32, %arg1: i32) -> (i32, i32) {
    %c0_i32 = arith.constant 0 : i32
    %c0_i32_0 = arith.constant 0 : i32
    %c0_i32_1 = arith.constant 0 : i32
    return %c0_i32, %c0_i32_0 : i32, i32
  }
  func.func @transform_2(%arg0: i32, %arg1: i32) -> (i32, i32) {
    %c0_i32 = arith.constant 0 : i32
    %c0_i32_0 = arith.constant 0 : i32
    %c0_i32_1 = arith.constant 0 : i32
    return %c0_i32, %c0_i32_0 : i32, i32
  }
  func.func @transform_3(%arg0: i32, %arg1: i32) -> (i32, i32) {
    %c0_i32 = arith.constant 0 : i32
    %c0_i32_0 = arith.constant 0 : i32
    %c0_i32_1 = arith.constant 0 : i32
    return %c0_i32, %c0_i32_0 : i32, i32
  }
  func.func @transform_4(%arg0: i32, %arg1: i32) -> (i32, i32) {
    %c0_i32 = arith.constant 0 : i32
    %c0_i32_0 = arith.constant 0 : i32
    %c0_i32_1 = arith.constant 0 : i32
    return %c0_i32, %c0_i32_0 : i32, i32
  }
  func.func @transform_5(%arg0: i32, %arg1: i32) -> (i32, i32, i32) {
    %c0_i32 = arith.constant 0 : i32
    %c0_i32_0 = arith.constant 0 : i32
    return %arg0, %c0_i32, %arg1 : i32, i32, i32
  }
}

</mosaic_0001>

<llo_original>
// kernel: simple_segmentation_model.3
$region0: #{simple_segmentation_model.3}
  #allocation0 [shape = 'u32[]', space=smem, size = 0x4, offset = 0x4, fixed_abs, tag = 'smem constant byte address 0x4 - core index']
  #allocation1 [shape = 'u32[144,128]{1,0:T(1,128)}', space=vmem, size = 0x12000, scoped, tag = 'internal scratch']
  %s0 = inlined_call_operand.vmem [shape: bf16[2,36,64], index: 0, kind: input, shape index: {}]
  %s1 = inlined_call_operand.vmem [shape: bf16[8,36], index: 1, kind: input, shape index: {}]
  %s2 = inlined_call_operand.vmem [shape: f32[8,1], index: 2, kind: input, shape index: {}]
  %s3 = inlined_call_operand.vmem [shape: bf16[5,8], index: 3, kind: input, shape index: {}]
  %s4 = inlined_call_operand.vmem [shape: f32[5,1], index: 4, kind: input, shape index: {}]
  %s5 = inlined_call_operand.vmem [shape: bf16[2,5,64], index: 5, kind: output, shape index: {}]
  %s6 = sld [smem:[#allocation0]]
  $region53: #{simple_segmentation_model.3} parent=0
    _
  %s8 = ssub.s32 1, %s6
  %s9 = scalar_select 0, %s8, %s6
  loop: start=0, step=1, limit=4
  $region2: #{simple_segmentation_model.3} parent=0 // loop_pre_header
    _
  $region3: #{simple_segmentation_model.3} parent=0 // loop_header
    %s11 = sphi 0, %s15
    %p12 = scmp.ge.s32.totalorder %s11, 4
    %s18 = sphi 0, %s30
    %s19 = sphi 0, %s26
    %s20 = sphi 0, %s18
    %s21 = sphi 0, %s19
    %s22 = sphi 0, %s20
    %s23 = sphi 0, %s21
    %s35 = sphi 0, %s37
    %s38 = sphi 0, %s35
    %s39 = sphi 0, %s38
    %s55 = sphi 0, %s39
    %s59 = sphi 0, %s59
    %s61 = sphi 0, %s59
    %s62 = sphi 0, %s61
    %s76 = sphi 0, %s62
    %s80 = sphi 0, %s80
    %s82 = sphi 0, %s80
    %s83 = sphi 0, %s82
    %s97 = sphi 0, %s83
    %s101 = sphi 0, %s101
    %s103 = sphi 0, %s101
    %s104 = sphi 0, %s103
    %s118 = sphi 0, %s104
    %s122 = sphi 0, %s122
    %s124 = sphi 0, %s122
    %s125 = sphi 0, %s124
    %s139 = sphi 0, %s125
    %s147 = sphi 0, %s149
    %s150 = sphi 0, %s147
    %s151 = sphi 0, %s150
    %s167 = sphi 0, %s151
  $region4: #{simple_segmentation_model.3} parent=0 // loop_header_branch
    %14 = sbr.rel (%p12) target = $region8
  $region5: #{simple_segmentation_model.3} parent=0 // loop_body
    %s16 = ssub.s32 %s11, 1
    %s17 = ssub.s32 %s11, 2
    %s24 = sadd.s32 1, %s19
    %p25 = scmp.ge.s32.totalorder %s24, 1
    %s26 = scalar_select %p25, 0, %s24
    %s27 = sadd.s32 1, %s18
    %s28 = scalar_select %p25, %s27, %s18
    %p29 = scmp.ge.s32.totalorder %s28, 2
    %s30 = scalar_select %p29, 0, %s28
    %s31 = ssub.s32 %s18, %s30
    %s32 = ssub.s32 %s19, %s26
    %s33 = sor.u32 %s31, %s32
    %p34 = scmp.eq.s32.totalorder %s33, 0
    %s36 = sadd.s32 %s35, 1
    %s37 = scalar_select %p34, %s35, %s36
    %p40 = pneg %p34
    %p41 = scmp.eq.s32.totalorder %s11, 1
    %p42 = por %p40, %p41
    %p43 = scmp.ne.s32.totalorder %s35, %s38
    %p44 = scmp.eq.s32.totalorder %s11, 0
    %p45 = por %p43, %p44
    %p46 = scmp.ne.s32.totalorder %s35, %s38
    %p47 = scmp.eq.s32.totalorder %s16, 1
    %p48 = por %p46, %p47
    %p49 = scmp.ne.s32.totalorder %s38, %s39
    %p50 = scmp.eq.s32.totalorder %s16, 0
    %p51 = por %p49, %p50
    %p52 = scmp.ne.s32.totalorder %s38, %s39
    %p53 = scmp.eq.s32.totalorder %s17, 1
    %p54 = por %p52, %p53
    %p56 = scmp.ne.s32.totalorder %s39, %s55
    %p57 = scmp.eq.s32.totalorder %s17, 0
    %p58 = por %p56, %p57
    %s60 = sadd.s32 %s59, 1
    %p63 = scmp.eq.s32.totalorder %s11, 1
    %p64 = scmp.ne.s32.totalorder %s59, %s61
    %p65 = scmp.eq.s32.totalorder %s11, 0
    %p66 = por %p64, %p65
    %p67 = scmp.ne.s32.totalorder %s59, %s61
    %p68 = scmp.eq.s32.totalorder %s16, 1
    %p69 = por %p67, %p68
    %p70 = scmp.ne.s32.totalorder %s61, %s62
    %p71 = scmp.eq.s32.totalorder %s16, 0
    %p72 = por %p70, %p71
    %p73 = scmp.ne.s32.totalorder %s61, %s62
    %p74 = scmp.eq.s32.totalorder %s17, 1
    %p75 = por %p73, %p74
    %p77 = scmp.ne.s32.totalorder %s62, %s76
    %p78 = scmp.eq.s32.totalorder %s17, 0
    %p79 = por %p77, %p78
    %s81 = sadd.s32 %s80, 1
    %p84 = scmp.eq.s32.totalorder %s11, 1
    %p85 = scmp.ne.s32.totalorder %s80, %s82
    %p86 = scmp.eq.s32.totalorder %s11, 0
    %p87 = por %p85, %p86
    %p88 = scmp.ne.s32.totalorder %s80, %s82
    %p89 = scmp.eq.s32.totalorder %s16, 1
    %p90 = por %p88, %p89
    %p91 = scmp.ne.s32.totalorder %s82, %s83
    %p92 = scmp.eq.s32.totalorder %s16, 0
    %p93 = por %p91, %p92
    %p94 = scmp.ne.s32.totalorder %s82, %s83
    %p95 = scmp.eq.s32.totalorder %s17, 1
    %p96 = por %p94, %p95
    %p98 = scmp.ne.s32.totalorder %s83, %s97
    %p99 = scmp.eq.s32.totalorder %s17, 0
    %p100 = por %p98, %p99
    %s102 = sadd.s32 %s101, 1
    %p105 = scmp.eq.s32.totalorder %s11, 1
    %p106 = scmp.ne.s32.totalorder %s101, %s103
    %p107 = scmp.eq.s32.totalorder %s11, 0
    %p108 = por %p106, %p107
    %p109 = scmp.ne.s32.totalorder %s101, %s103
    %p110 = scmp.eq.s32.totalorder %s16, 1
    %p111 = por %p109, %p110
    %p112 = scmp.ne.s32.totalorder %s103, %s104
    %p113 = scmp.eq.s32.totalorder %s16, 0
    %p114 = por %p112, %p113
    %p115 = scmp.ne.s32.totalorder %s103, %s104
    %p116 = scmp.eq.s32.totalorder %s17, 1
    %p117 = por %p115, %p116
    %p119 = scmp.ne.s32.totalorder %s104, %s118
    %p120 = scmp.eq.s32.totalorder %s17, 0
    %p121 = por %p119, %p120
    %s123 = sadd.s32 %s122, 1
    %p126 = scmp.eq.s32.totalorder %s11, 1
    %p127 = scmp.ne.s32.totalorder %s122, %s124
    %p128 = scmp.eq.s32.totalorder %s11, 0
    %p129 = por %p127, %p128
    %p130 = scmp.ne.s32.totalorder %s122, %s124
    %p131 = scmp.eq.s32.totalorder %s16, 1
    %p132 = por %p130, %p131
    %p133 = scmp.ne.s32.totalorder %s124, %s125
    %p134 = scmp.eq.s32.totalorder %s16, 0
    %p135 = por %p133, %p134
    %p136 = scmp.ne.s32.totalorder %s124, %s125
    %p137 = scmp.eq.s32.totalorder %s17, 1
    %p138 = por %p136, %p137
    %p140 = scmp.ne.s32.totalorder %s125, %s139
    %p141 = scmp.eq.s32.totalorder %s17, 0
    %p142 = por %p140, %p141
    %s143 = ssub.s32 %s18, %s30
    %s144 = ssub.s32 %s19, %s26
    %s145 = sor.u32 %s143, %s144
    %p146 = scmp.eq.s32.totalorder %s145, 0
    %s148 = sadd.s32 %s147, 1
    %s149 = scalar_select %p146, %s147, %s148
    %p152 = pneg %p146
    %p153 = scmp.eq.s32.totalorder %s11, 1
    %p154 = por %p152, %p153
    %p155 = scmp.ne.s32.totalorder %s147, %s150
    %p156 = scmp.eq.s32.totalorder %s11, 0
    %p157 = por %p155, %p156
    %p158 = scmp.ne.s32.totalorder %s147, %s150
    %p159 = scmp.eq.s32.totalorder %s16, 1
    %p160 = por %p158, %p159
    %p161 = scmp.ne.s32.totalorder %s150, %s151
    %p162 = scmp.eq.s32.totalorder %s16, 0
    %p163 = por %p161, %p162
    %p164 = scmp.ne.s32.totalorder %s150, %s151
    %p165 = scmp.eq.s32.totalorder %s17, 1
    %p166 = por %p164, %p165
    %p168 = scmp.ne.s32.totalorder %s151, %s167
    %p169 = scmp.eq.s32.totalorder %s17, 0
    %p170 = por %p168, %p169
    %p171 = scmp.le.s32.totalorder 1, %s11
    %p172 = scmp.lt.s32.totalorder %s11, 3
    %p173 = pnand %p171, %p172
    %p174 = pneg %p173
    // Predicated region
    $region9: #{simple_segmentation_model.3} parent=5 // pred_check
      _
    $region10: #{simple_segmentation_model.3} parent=5 // pred_check_branch
      %176 = sbr.rel (%p173) target = $region12
    $region11: #{simple_segmentation_model.3} parent=5 // pred_region
      %s177 = ssub.s32 %s11, 1
      // Predicated region
      $region13: #{simple_segmentation_model.3} parent=11 // pred_check
        %p178 = pneg %p72
      $region14: #{simple_segmentation_model.3} parent=11 // pred_check_branch
        %180 = sbr.rel (%p178) target = $region16
      $region15: #{simple_segmentation_model.3} parent=11 // pred_region
        _
      $region16: #{simple_segmentation_model.3} parent=11 // pred_fallthru
        _
      // Predicated region
      $region17: #{simple_segmentation_model.3} parent=11 // pred_check
        %p181 = pneg %p93
      $region18: #{simple_segmentation_model.3} parent=11 // pred_check_branch
        %183 = sbr.rel (%p181) target = $region20
      $region19: #{simple_segmentation_model.3} parent=11 // pred_region
        _
      $region20: #{simple_segmentation_model.3} parent=11 // pred_fallthru
        _
      // Predicated region
      $region21: #{simple_segmentation_model.3} parent=11 // pred_check
        %p184 = pneg %p114
      $region22: #{simple_segmentation_model.3} parent=11 // pred_check_branch
        %186 = sbr.rel (%p184) target = $region24
      $region23: #{simple_segmentation_model.3} parent=11 // pred_region
        _
      $region24: #{simple_segmentation_model.3} parent=11 // pred_fallthru
        _
      // Predicated region
      $region25: #{simple_segmentation_model.3} parent=11 // pred_check
        %p187 = pneg %p135
      $region26: #{simple_segmentation_model.3} parent=11 // pred_check_branch
        %189 = sbr.rel (%p187) target = $region28
      $region27: #{simple_segmentation_model.3} parent=11 // pred_region
        _
      $region28: #{simple_segmentation_model.3} parent=11 // pred_fallthru
        _
    $region12: #{simple_segmentation_model.3} parent=5 // pred_fallthru
      _
    %p190 = scmp.lt.s32.totalorder %s11, 2
    // Predicated region
    $region29: #{simple_segmentation_model.3} parent=5 // pred_check
      %p191 = pneg %p190
    $region30: #{simple_segmentation_model.3} parent=5 // pred_check_branch
      %193 = sbr.rel (%p191) target = $region32
    $region31: #{simple_segmentation_model.3} parent=5 // pred_region
      // Predicated region
      $region33: #{simple_segmentation_model.3} parent=31 // pred_check
        %p194 = pneg %p45
      $region34: #{simple_segmentation_model.3} parent=31 // pred_check_branch
        %196 = sbr.rel (%p194) target = $region36
      $region35: #{simple_segmentation_model.3} parent=31 // pred_region
        %p197 = scmp.lt.s32.totalorder %s18, 1
        %s198 = scalar_select %p197, %s18, 1
        %p199 = scmp.lt.s32.totalorder %s19, 0
        %s200 = scalar_select %p199, %s19, 0
        %s201 = smul.addr %s198, 5
        %s202 = sadd.s32 %s200, %s201
        %s203 = smul.addr %s202, 4
        %s204 = scalar_lea.vmem %s0, %s203
      $region36: #{simple_segmentation_model.3} parent=31 // pred_fallthru
        _
    $region32: #{simple_segmentation_model.3} parent=5 // pred_fallthru
      _
    %p205 = scmp.le.s32.totalorder 1, %s11
    %p206 = scmp.lt.s32.totalorder %s11, 3
    %p207 = pnand %p205, %p206
    %p208 = pneg %p207
    // Predicated region
    $region37: #{simple_segmentation_model.3} parent=5 // pred_check
      _
    $region38: #{simple_segmentation_model.3} parent=5 // pred_check_branch
      %210 = sbr.rel (%p207) target = $region40
    $region39: #{simple_segmentation_model.3} parent=5 // pred_region
      %s211 = ssub.s32 %s11, 1
      %p212 = scmp.lt.s32.totalorder %s20, 1
      %s213 = scalar_select %p212, %s20, 1
      %p214 = scmp.lt.s32.totalorder %s21, 0
      %s215 = scalar_select %p214, %s21, 0
      %s216 = smul.addr %s213, 5
      %s217 = sadd.s32 %s215, %s216
      %s218 = smul.addr %s217, 4
      %s219 = scalar_lea.vmem %s0, %s218
      %p220 = pneg %p51
      %p221 = pneg %p48
      %p222 = pneg %p72
      %p223 = pneg %p69
      %p224 = pneg %p93
      %p225 = pneg %p90
      %p226 = pneg %p114
      %p227 = pneg %p111
      %p228 = pneg %p135
      %p229 = pneg %p132
      %p230 = pneg %p163
      %p231 = pneg %p160
      %p232 = scmp.lt.s32.totalorder %s20, 1
      %s233 = scalar_select %p232, %s20, 1
      %p234 = scmp.lt.s32.totalorder %s21, 0
      %s235 = scalar_select %p234, %s21, 0
      %s236 = sadd.s32 %s235, %s233
      %s237 = smul.addr %s236, 4
      %s238 = scalar_lea.vmem %s5, %s237
      %p239 = scmp.lt.s32.totalorder %s20, 1
      %s240 = scalar_select %p239, %s20, 1
      %p241 = scmp.lt.s32.totalorder %s21, 0
      %s242 = scalar_select %p241, %s21, 0
      %s243 = smul.addr %s240, 5
      %s244 = sadd.s32 %s242, %s243
      %s245 = smul.addr %s244, 4
      %s246 = scalar_lea.vmem %s0, %s245
      %p247 = scmp.lt.s32.totalorder %s20, 1
      %s248 = scalar_select %p247, %s20, 1
      %p249 = scmp.lt.s32.totalorder %s21, 0
      %s250 = scalar_select %p249, %s21, 0
      %s251 = sadd.s32 %s250, %s248
      %s252 = smul.addr %s251, 4
      %s253 = scalar_lea.vmem %s5, %s252
      %v255 = vld [vmem:[%s1] sm:$0xf]
      %v256 = vld [vmem:[%s246] sm:$0xf]
      %v257 = vld [vmem:[%s246 + $0x4] sm:$0xf]
      %v258 = vld [vmem:[%s246 + $0x8] sm:$0xf]
      %v259 = vld [vmem:[%s246 + $0xc] sm:$0xf]
      %v260 = vld [vmem:[%s246 + $0x10] sm:$0x3]
      %v261 = vld [vmem:[%s2] sm:$0xff]
      %263 = vset.pattern.permute.xlu0 0
      %264 = vperm.xlu0 %263, %v261
      %v265 = vpop.permute.xlu0 %264
      %v272 = vunpack.c.l.b16 %v256
      %v273 = vunpack.c.l.b16 %v257
      %v274 = vunpack.c.l.b16 %v258
      %v275 = vunpack.c.l.b16 %v259
      %v276 = vunpack.c.l.b16 %v260
      %v277 = vpack.c.b16 %v273, %v272
      %v278 = vpack.c.b16 %v275, %v274
      %v279 = vpack.c.b16 %v276, %v276
      %vm282 = vcmask 293888
      %v284 = vsel %vm282, %v255, 0
      %vm286 = vcmask 1041408
      %v288 = vsel %vm286, %v279, 0
      %290 = vmatprep.subr.bf16.mxu0 0
      %291 = vmatpush1.bf16.msra.mxu0 0
      %292 = vmatprep.subr.bf16.mxu0 0
      %293 = vmatpush1.bf16.msra.mxu0 0
      %294 = vmatprep.subr.bf16.mxu0 0
      %295 = vmatpush1.bf16.msra.mxu0 0
      %296 = vmatprep.subr.bf16.mxu0 0
      %297 = vmatpush1.bf16.msra.mxu0 0
      %298 = vmatprep.subr.bf16.mxu0 0
      %299 = vmatpush1.bf16.msra.mxu0 0
      %300 = vmatprep.subr.bf16.mxu0 0
      %301 = vmatpush1.bf16.msra.mxu0 %v288
      %302 = vmatprep.subr.bf16.mxu0 0
      %303 = vmatpush1.bf16.msra.mxu0 %v278
      %304 = vmatprep.subr.bf16.mxu0 0
      %305 = vmatpush1.bf16.msra.mxu0 %v277
      %306 = vmatprep.subr.bf16.mxu0 0
      %307 = vmatpush2.bf16.msra.mxu0 0
      %308 = vmatprep.subr.bf16.mxu0 0
      %309 = vmatpush2.bf16.msra.mxu0 0
      %310 = vmatprep.subr.bf16.mxu0 0
      %311 = vmatpush2.bf16.msra.mxu0 0
      %312 = vmatprep.subr.bf16.mxu0 0
      %313 = vmatpush2.bf16.msra.mxu0 0
      %314 = vmatprep.subr.bf16.mxu0 0
      %315 = vmatpush2.bf16.msra.mxu0 0
      %316 = vmatprep.subr.bf16.mxu0 0
      %317 = vmatpush2.bf16.msra.mxu0 0
      %318 = vmatprep.subr.bf16.mxu0 0
      %319 = vmatpush2.bf16.msra.mxu0 0
      %320 = vmatprep.subr.bf16.mxu0 0
      %321 = vmatpush2.bf16.msra.mxu0 0
      %322 = vmatprep.mubr.bf16.mxu0 0
      %323 = vmatmul.mubr.bf16.gmra.mxu0 %v284
      %v324 = vpop.f32.mrf.mxu0
      %v325 = vadd.f32 %v265, %v324
      %v326 = vpop.f32.mrf.mxu0
      %v327 = vpop.f32.mrf.mxu0
      %v328 = vpop.f32.mrf.mxu0
      %329 = vdwg.mxu0
      %v330 = vmax.f32 %v325, 0.0
      %v331 = vld [vmem:[%s3] sm:$0x7]
      %v332 = vpack.c.bf16 %v330, %v330
      %v333 = vld [vmem:[%s4] sm:$0x1f]
      %335 = vset.pattern.permute.xlu0 0
      %336 = vperm.xlu0 %335, %v333
      %v337 = vpop.permute.xlu0 %336
      %vm339 = vcmask 64512
      %v341 = vsel %vm339, %v331, 0
      %vm343 = vcmask 1043456
      %v345 = vsel %vm343, %v332, 0
      %347 = vmatprep.subr.bf16.mxu0 0
      %348 = vmatpush1.bf16.msra.mxu0 0
      %349 = vmatprep.subr.bf16.mxu0 0
      %350 = vmatpush1.bf16.msra.mxu0 0
      %351 = vmatprep.subr.bf16.mxu0 0
      %352 = vmatpush1.bf16.msra.mxu0 0
      %353 = vmatprep.subr.bf16.mxu0 0
      %354 = vmatpush1.bf16.msra.mxu0 0
      %355 = vmatprep.subr.bf16.mxu0 0
      %356 = vmatpush1.bf16.msra.mxu0 0
      %357 = vmatprep.subr.bf16.mxu0 0
      %358 = vmatpush1.bf16.msra.mxu0 0
      %359 = vmatprep.subr.bf16.mxu0 0
      %360 = vmatpush1.bf16.msra.mxu0 0
      %361 = vmatprep.subr.bf16.mxu0 0
      %362 = vmatpush1.bf16.msra.mxu0 %v345
      %363 = vmatprep.subr.bf16.mxu0 0
      %364 = vmatpush2.bf16.msra.mxu0 0
      %365 = vmatprep.subr.bf16.mxu0 0
      %366 = vmatpush2.bf16.msra.mxu0 0
      %367 = vmatprep.subr.bf16.mxu0 0
      %368 = vmatpush2.bf16.msra.mxu0 0
      %369 = vmatprep.subr.bf16.mxu0 0
      %370 = vmatpush2.bf16.msra.mxu0 0
      %371 = vmatprep.subr.bf16.mxu0 0
      %372 = vmatpush2.bf16.msra.mxu0 0
      %373 = vmatprep.subr.bf16.mxu0 0
      %374 = vmatpush2.bf16.msra.mxu0 0
      %375 = vmatprep.subr.bf16.mxu0 0
      %376 = vmatpush2.bf16.msra.mxu0 0
      %377 = vmatprep.subr.bf16.mxu0 0
      %378 = vmatpush2.bf16.msra.mxu0 0
      %379 = vmatprep.mubr.bf16.mxu0 0
      %380 = vmatmul.mubr.bf16.gmra.mxu0 %v341
      %v381 = vpop.f32.mrf.mxu0
      %v382 = vadd.f32 %v337, %v381
      %v383 = vpop.f32.mrf.mxu0
      %v384 = vpop.f32.mrf.mxu0
      %v385 = vpop.f32.mrf.mxu0
      %386 = vdwg.mxu0
      %v387 = vpack.c.bf16 %v382, %v382
      %vm388 = vcmask 518144
      %vm389 = vsmask.f32 2304
      %vm390 = vmand %vm388, %vm389
      %v391 = vld [vmem:[%s253] sm:$0x7]
      %v392 = vsel %vm390, %v387, %v391
      %393 = vst [vmem:[%s253] sm:$0x7] %v392
      %p394 = scmp.lt.s32.totalorder %s20, 1
      %s395 = scalar_select %p394, %s20, 1
      %p396 = scmp.lt.s32.totalorder %s21, 0
      %s397 = scalar_select %p396, %s21, 0
      %s398 = sadd.s32 %s397, %s395
      %s399 = smul.addr %s398, 4
      %s400 = scalar_lea.vmem %s5, %s399
      // Predicated region
      $region41: #{simple_segmentation_model.3} parent=39 // pred_check
        %p401 = pneg %p160
      $region42: #{simple_segmentation_model.3} parent=39 // pred_check_branch
        %403 = sbr.rel (%p401) target = $region44
      $region43: #{simple_segmentation_model.3} parent=39 // pred_region
        _
      $region44: #{simple_segmentation_model.3} parent=39 // pred_fallthru
        _
    $region40: #{simple_segmentation_model.3} parent=5 // pred_fallthru
      _
    %p404 = scmp.le.s32.totalorder 2, %s11
    // Predicated region
    $region45: #{simple_segmentation_model.3} parent=5 // pred_check
      %p405 = pneg %p404
    $region46: #{simple_segmentation_model.3} parent=5 // pred_check_branch
      %407 = sbr.rel (%p405) target = $region48
    $region47: #{simple_segmentation_model.3} parent=5 // pred_region
      %s408 = ssub.s32 %s11, 2
      // Predicated region
      $region49: #{simple_segmentation_model.3} parent=47 // pred_check
        %p409 = pneg %p166
      $region50: #{simple_segmentation_model.3} parent=47 // pred_check_branch
        %411 = sbr.rel (%p409) target = $region52
      $region51: #{simple_segmentation_model.3} parent=47 // pred_region
        %p412 = scmp.lt.s32.totalorder %s22, 1
        %s413 = scalar_select %p412, %s22, 1
        %p414 = scmp.lt.s32.totalorder %s23, 0
        %s415 = scalar_select %p414, %s23, 0
        %s416 = sadd.s32 %s415, %s413
        %s417 = smul.addr %s416, 4
        %s418 = scalar_lea.vmem %s5, %s417
      $region52: #{simple_segmentation_model.3} parent=47 // pred_fallthru
        _
    $region48: #{simple_segmentation_model.3} parent=5 // pred_fallthru
      _
  $region6: #{simple_segmentation_model.3} parent=0 // loop_footer
    %s15 = sadd.s32 1, %s11
  $region7: #{simple_segmentation_model.3} parent=0 // loop_footer_branch
    %10 = sbr.rel target = $region3
  $region8: #{simple_segmentation_model.3} parent=0 // loop_exit
    _

// kernel: simple_segmentation_model.5
$region0: #{simple_segmentation_model.5}
  #allocation0 [shape = 'u32[]', space=smem, size = 0x4, offset = 0x4, fixed_abs, tag = 'smem constant byte address 0x4 - core index']
  #allocation1 [shape = 'u32[144,128]{1,0:T(1,128)}', space=vmem, size = 0x12000, scoped, tag = 'internal scratch']
  %s0 = inlined_call_operand.vmem [shape: bf16[16,8], index: 0, kind: input, shape index: {}]
  %s1 = inlined_call_operand.vmem [shape: bf16[2,5,8,16], index: 1, kind: input, shape index: {}]
  %s2 = inlined_call_operand.hbm [shape: f32[2,5,16,16], index: 2, kind: output, shape index: {}]
  %s3 = sld [smem:[#allocation0]]
  $region41: #{simple_segmentation_model.5} parent=0
    _
  %s5 = ssub.s32 1, %s3
  %s6 = scalar_select 0, %s5, %s3
  $region1: #{simple_segmentation_model.5} parent=0
    #allocation2 [shape = 'u8[16384]{0}', space=vmem, size = 0x4000, scoped, tag = 'output window, operand 0']
    #allocation3 [shape = 's32[2]{0}', space=sflag, size = 0x8, scoped, tag = 'scoped memory for simple_segmentation_model.5']
    %7 = vsyncpa [#allocation3], 0
    %s8 = scalar_lea.sflag [#allocation3], 1
    %9 = vsyncpa %s8, 0
    loop: start=0, step=1, limit=12
    $region2: #{simple_segmentation_model.5} parent=1 // loop_pre_header
      _
    $region3: #{simple_segmentation_model.5} parent=1 // loop_header
      %s11 = sphi 0, %s15
      %p12 = scmp.ge.s32.totalorder %s11, 12
      %s18 = sphi 0, %s44
      %s19 = sphi 0, %s40
      %s20 = sphi 0, %s36
      %s21 = sphi 0, %s32
      %s22 = sphi 0, %s18
      %s23 = sphi 0, %s19
      %s24 = sphi 0, %s20
      %s25 = sphi 0, %s21
      %s26 = sphi 0, %s22
      %s27 = sphi 0, %s23
      %s28 = sphi 0, %s24
      %s29 = sphi 0, %s25
      %s47 = sphi 0, %s49
      %s50 = sphi 0, %s47
      %s51 = sphi 0, %s50
      %s67 = sphi 0, %s51
      %s77 = sphi 0, %s79
      %s80 = sphi 0, %s77
      %s81 = sphi 0, %s80
      %s97 = sphi 0, %s81
      %s109 = sphi 0, %s111
      %s112 = sphi 0, %s109
      %s113 = sphi 0, %s112
      %s129 = sphi 0, %s113
    $region4: #{simple_segmentation_model.5} parent=1 // loop_header_branch
      %14 = sbr.rel (%p12) target = $region8
    $region5: #{simple_segmentation_model.5} parent=1 // loop_body
      %s16 = ssub.s32 %s11, 1
      %s17 = ssub.s32 %s11, 2
      %s30 = sadd.s32 1, %s21
      %p31 = scmp.ge.s32.totalorder %s30, 1
      %s32 = scalar_select %p31, 0, %s30
      %s33 = sadd.s32 1, %s20
      %s34 = scalar_select %p31, %s33, %s20
      %p35 = scmp.ge.s32.totalorder %s34, 1
      %s36 = scalar_select %p35, 0, %s34
      %s37 = sadd.s32 1, %s19
      %s38 = scalar_select %p35, %s37, %s19
      %p39 = scmp.ge.s32.totalorder %s38, 5
      %s40 = scalar_select %p39, 0, %s38
      %s41 = sadd.s32 1, %s18
      %s42 = scalar_select %p39, %s41, %s18
      %p43 = scmp.ge.s32.totalorder %s42, 2
      %s44 = scalar_select %p43, 0, %s42
      %s45 = ssub.s32 %s20, %s36
      %p46 = scmp.eq.s32.totalorder %s45, 0
      %s48 = sadd.s32 %s47, 1
      %s49 = scalar_select %p46, %s47, %s48
      %p52 = pneg %p46
      %p53 = scmp.eq.s32.totalorder %s11, 9
      %p54 = por %p52, %p53
      %p55 = scmp.ne.s32.totalorder %s47, %s50
      %p56 = scmp.eq.s32.totalorder %s11, 0
      %p57 = por %p55, %p56
      %p58 = scmp.ne.s32.totalorder %s47, %s50
      %p59 = scmp.eq.s32.totalorder %s16, 9
      %p60 = por %p58, %p59
      %p61 = scmp.ne.s32.totalorder %s50, %s51
      %p62 = scmp.eq.s32.totalorder %s16, 0
      %p63 = por %p61, %p62
      %p64 = scmp.ne.s32.totalorder %s50, %s51
      %p65 = scmp.eq.s32.totalorder %s17, 9
      %p66 = por %p64, %p65
      %p68 = scmp.ne.s32.totalorder %s51, %s67
      %p69 = scmp.eq.s32.totalorder %s17, 0
      %p70 = por %p68, %p69
      %s71 = ssub.s32 %s18, %s44
      %s72 = ssub.s32 %s19, %s40
      %s73 = sor.u32 %s71, %s72
      %s74 = ssub.s32 %s21, %s32
      %s75 = sor.u32 %s73, %s74
      %p76 = scmp.eq.s32.totalorder %s75, 0
      %s78 = sadd.s32 %s77, 1
      %s79 = scalar_select %p76, %s77, %s78
      %p82 = pneg %p76
      %p83 = scmp.eq.s32.totalorder %s11, 9
      %p84 = por %p82, %p83
      %p85 = scmp.ne.s32.totalorder %s77, %s80
      %p86 = scmp.eq.s32.totalorder %s11, 0
      %p87 = por %p85, %p86
      %p88 = scmp.ne.s32.totalorder %s77, %s80
      %p89 = scmp.eq.s32.totalorder %s16, 9
      %p90 = por %p88, %p89
      %p91 = scmp.ne.s32.totalorder %s80, %s81
      %p92 = scmp.eq.s32.totalorder %s16, 0
      %p93 = por %p91, %p92
      %p94 = scmp.ne.s32.totalorder %s80, %s81
      %p95 = scmp.eq.s32.totalorder %s17, 9
      %p96 = por %p94, %p95
      %p98 = scmp.ne.s32.totalorder %s81, %s97
      %p99 = scmp.eq.s32.totalorder %s17, 0
      %p100 = por %p98, %p99
      %s101 = ssub.s32 %s18, %s44
      %s102 = ssub.s32 %s19, %s40
      %s103 = sor.u32 %s101, %s102
      %s104 = ssub.s32 %s20, %s36
      %s105 = sor.u32 %s103, %s104
      %s106 = ssub.s32 %s21, %s32
      %s107 = sor.u32 %s105, %s106
      %p108 = scmp.eq.s32.totalorder %s107, 0
      %s110 = sadd.s32 %s109, 1
      %s111 = scalar_select %p108, %s109, %s110
      %p114 = pneg %p108
      %p115 = scmp.eq.s32.totalorder %s11, 9
      %p116 = por %p114, %p115
      %p117 = scmp.ne.s32.totalorder %s109, %s112
      %p118 = scmp.eq.s32.totalorder %s11, 0
      %p119 = por %p117, %p118
      %p120 = scmp.ne.s32.totalorder %s109, %s112
      %p121 = scmp.eq.s32.totalorder %s16, 9
      %p122 = por %p120, %p121
      %p123 = scmp.ne.s32.totalorder %s112, %s113
      %p124 = scmp.eq.s32.totalorder %s16, 0
      %p125 = por %p123, %p124
      %p126 = scmp.ne.s32.totalorder %s112, %s113
      %p127 = scmp.eq.s32.totalorder %s17, 9
      %p128 = por %p126, %p127
      %p130 = scmp.ne.s32.totalorder %s113, %s129
      %p131 = scmp.eq.s32.totalorder %s17, 0
      %p132 = por %p130, %p131
      %p133 = scmp.le.s32.totalorder 1, %s11
      %p134 = scmp.lt.s32.totalorder %s11, 11
      %p135 = pnand %p133, %p134
      %p136 = pneg %p135
      // Predicated region
      $region9: #{simple_segmentation_model.5} parent=5 // pred_check
        _
      $region10: #{simple_segmentation_model.5} parent=5 // pred_check_branch
        %138 = sbr.rel (%p135) target = $region12
      $region11: #{simple_segmentation_model.5} parent=5 // pred_region
        %s139 = ssub.s32 %s11, 1
        // Predicated region
        $region13: #{simple_segmentation_model.5} parent=11 // pred_check
          %p140 = pneg %p63
        $region14: #{simple_segmentation_model.5} parent=11 // pred_check_branch
          %142 = sbr.rel (%p140) target = $region16
        $region15: #{simple_segmentation_model.5} parent=11 // pred_region
          %s143 = smul.u32 2, %s24
          %p144 = scmp.lt.s32.totalorder %s143, 1
          %s145 = scalar_select %p144, %s143, 1
          %s146 = smul.addr %s145, 4
          %s147 = scalar_lea.vmem %s0, %s146
          %s148 = smul.u32 2, %s24
        $region16: #{simple_segmentation_model.5} parent=11 // pred_fallthru
          _
      $region12: #{simple_segmentation_model.5} parent=5 // pred_fallthru
        _
      %p149 = scmp.lt.s32.totalorder %s11, 10
      // Predicated region
      $region17: #{simple_segmentation_model.5} parent=5 // pred_check
        %p150 = pneg %p149
      $region18: #{simple_segmentation_model.5} parent=5 // pred_check_branch
        %152 = sbr.rel (%p150) target = $region20
      $region19: #{simple_segmentation_model.5} parent=5 // pred_region
        // Predicated region
        $region21: #{simple_segmentation_model.5} parent=19 // pred_check
          %p153 = pneg %p87
        $region22: #{simple_segmentation_model.5} parent=19 // pred_check_branch
          %155 = sbr.rel (%p153) target = $region24
        $region23: #{simple_segmentation_model.5} parent=19 // pred_region
          %p156 = scmp.lt.s32.totalorder %s18, 1
          %s157 = scalar_select %p156, %s18, 1
          %p158 = scmp.lt.s32.totalorder %s19, 4
          %s159 = scalar_select %p158, %s19, 4
          %p160 = scmp.lt.s32.totalorder %s21, 0
          %s161 = scalar_select %p160, %s21, 0
          %s162 = sadd.s32 %s161, %s159
          %s163 = smul.addr %s157, 5
          %s164 = sadd.s32 %s162, %s163
          %s165 = smul.addr %s164, 4
          %s166 = scalar_lea.vmem %s1, %s165
        $region24: #{simple_segmentation_model.5} parent=19 // pred_fallthru
          _
      $region20: #{simple_segmentation_model.5} parent=5 // pred_fallthru
        _
      %p167 = scmp.le.s32.totalorder 1, %s11
      %p168 = scmp.lt.s32.totalorder %s11, 11
      %p169 = pnand %p167, %p168
      %p170 = pneg %p169
      // Predicated region
      $region25: #{simple_segmentation_model.5} parent=5 // pred_check
        _
      $region26: #{simple_segmentation_model.5} parent=5 // pred_check_branch
        %172 = sbr.rel (%p169) target = $region28
      $region27: #{simple_segmentation_model.5} parent=5 // pred_region
        %s173 = ssub.s32 %s11, 1
        %s174 = smul.u32 2, %s24
        %p175 = scmp.lt.s32.totalorder %s174, 1
        %s176 = scalar_select %p175, %s174, 1
        %s177 = smul.addr %s176, 4
        %s178 = scalar_lea.vmem %s0, %s177
        %p179 = pneg %p63
        %p180 = pneg %p60
        %p181 = scmp.lt.s32.totalorder %s22, 1
        %s182 = scalar_select %p181, %s22, 1
        %p183 = scmp.lt.s32.totalorder %s23, 4
        %s184 = scalar_select %p183, %s23, 4
        %p185 = scmp.lt.s32.totalorder %s25, 0
        %s186 = scalar_select %p185, %s25, 0
        %s187 = sadd.s32 %s186, %s184
        %s188 = smul.addr %s182, 5
        %s189 = sadd.s32 %s187, %s188
        %s190 = smul.addr %s189, 4
        %s191 = scalar_lea.vmem %s1, %s190
        %p192 = pneg %p93
        %p193 = pneg %p90
        %p194 = pneg %p125
        %p195 = pneg %p122
        %s196 = sand.u32 %s112, 1
        %s197 = scalar_lea.sflag [#allocation3], %s196
        %s198 = sand.u32 %s112, 1
        %s199 = smul.addr %s198, 16
        %s200 = scalar_lea.vmem [#allocation2], %s199
        %s201 = smul.u32 2, %s24
        %p202 = scmp.lt.s32.totalorder %s201, 1
        %s203 = scalar_select %p202, %s201, 1
        %s204 = smul.addr %s203, 4
        %s205 = scalar_lea.vmem %s0, %s204
        %s206 = smul.u32 2, %s24
        %p207 = scmp.lt.s32.totalorder %s22, 1
        %s208 = scalar_select %p207, %s22, 1
        %p209 = scmp.lt.s32.totalorder %s23, 4
        %s210 = scalar_select %p209, %s23, 4
        %p211 = scmp.lt.s32.totalorder %s25, 0
        %s212 = scalar_select %p211, %s25, 0
        %s213 = sadd.s32 %s212, %s210
        %s214 = smul.addr %s208, 5
        %s215 = sadd.s32 %s213, %s214
        %s216 = smul.addr %s215, 4
        %s217 = scalar_lea.vmem %s1, %s216
        %s218 = smul.u32 2, %s24
        %v220 = vld [vmem:[%s205] sm:$0xf]
        %v221 = vld [vmem:[%s205 + $0x4] sm:$0xf]
        %v222 = vld [vmem:[%s217] sm:$0xf]
        %v225 = vunpack.c.l.b16 %v220
        %v226 = vunpack.c.l.b16 %v221
        %v227 = vpack.c.b16 %v226, %v225
        %vm228 = vcmask 64512
        %v230 = vsel %vm228, %v227, 0
        %vm232 = vcmask 1043456
        %v234 = vsel %vm232, %v222, 0
        %236 = vmatprep.subr.bf16.mxu0 0
        %237 = vmatpush1.bf16.msra.mxu0 0
        %238 = vmatprep.subr.bf16.mxu0 0
        %239 = vmatpush1.bf16.msra.mxu0 0
        %240 = vmatprep.subr.bf16.mxu0 0
        %241 = vmatpush1.bf16.msra.mxu0 0
        %242 = vmatprep.subr.bf16.mxu0 0
        %243 = vmatpush1.bf16.msra.mxu0 0
        %244 = vmatprep.subr.bf16.mxu0 0
        %245 = vmatpush1.bf16.msra.mxu0 0
        %246 = vmatprep.subr.bf16.mxu0 0
        %247 = vmatpush1.bf16.msra.mxu0 0
        %248 = vmatprep.subr.bf16.mxu0 0
        %249 = vmatpush1.bf16.msra.mxu0 0
        %250 = vmatprep.subr.bf16.mxu0 0
        %251 = vmatpush1.bf16.msra.mxu0 %v234
        %252 = vmatprep.subr.bf16.mxu0 0
        %253 = vmatpush2.bf16.msra.mxu0 0
        %254 = vmatprep.subr.bf16.mxu0 0
        %255 = vmatpush2.bf16.msra.mxu0 0
        %256 = vmatprep.subr.bf16.mxu0 0
        %257 = vmatpush2.bf16.msra.mxu0 0
        %258 = vmatprep.subr.bf16.mxu0 0
        %259 = vmatpush2.bf16.msra.mxu0 0
        %260 = vmatprep.subr.bf16.mxu0 0
        %261 = vmatpush2.bf16.msra.mxu0 0
        %262 = vmatprep.subr.bf16.mxu0 0
        %263 = vmatpush2.bf16.msra.mxu0 0
        %264 = vmatprep.subr.bf16.mxu0 0
        %265 = vmatpush2.bf16.msra.mxu0 0
        %266 = vmatprep.subr.bf16.mxu0 0
        %267 = vmatpush2.bf16.msra.mxu0 0
        %268 = vmatprep.mubr.bf16.mxu0 0
        %269 = vmatmul.mubr.bf16.gmra.mxu0 %v230
        %v270 = vpop.f32.mrf.mxu0
        %v271 = vadd.f32 0.0, %v270
        %v272 = vpop.f32.mrf.mxu0
        %v273 = vpop.f32.mrf.mxu0
        %v274 = vadd.f32 0.0, %v273
        %v275 = vpop.f32.mrf.mxu0
        %276 = vdwg.mxu0
        %vm277 = vcmask 130048
        %278 = vst.msk [vmem:[%s200] sm:$0xff] %vm277, %v271
        %279 = vst.msk [vmem:[%s200 + $0x8] sm:$0xff] %vm277, %v274
        %s280 = sand.u32 %s112, 1
        %s281 = scalar_lea.sflag [#allocation3], %s280
        %s282 = sand.u32 %s112, 1
        %s283 = smul.addr %s282, 16
        %s284 = scalar_lea.vmem [#allocation2], %s283
        // Predicated region
        $region29: #{simple_segmentation_model.5} parent=27 // pred_check
          %p285 = pneg %p122
        $region30: #{simple_segmentation_model.5} parent=27 // pred_check_branch
          %287 = sbr.rel (%p285) target = $region32
        $region31: #{simple_segmentation_model.5} parent=27 // pred_region
          %s288 = smul.u32 2, %s24
          %s290 = ssub.s32 256, 256
          %291 = vsyncadd %s281, %s290
          %s292 = sadd.s32 %s25, %s288
          %s293 = smul.addr %s23, 2
          %s294 = sadd.s32 %s292, %s293
          %s295 = smul.addr %s22, 10
          %s296 = sadd.s32 %s294, %s295
          %s297 = smul.addr %s296, 128
          %s298 = scalar_lea.hbm %s2, %s297
          %s299 = sshll.u32 %s284, 4
          %s300 = int_to_ptr.vmem [resolvable:$true] %s299
          %305 = dma.vmem_to_hbm [thread:$0]  %s300, 256, %s298, %s281, 128, 128, 8
        $region32: #{simple_segmentation_model.5} parent=27 // pred_fallthru
          _
      $region28: #{simple_segmentation_model.5} parent=5 // pred_fallthru
        _
      %p306 = scmp.le.s32.totalorder 2, %s11
      // Predicated region
      $region33: #{simple_segmentation_model.5} parent=5 // pred_check
        %p307 = pneg %p306
      $region34: #{simple_segmentation_model.5} parent=5 // pred_check_branch
        %309 = sbr.rel (%p307) target = $region36
      $region35: #{simple_segmentation_model.5} parent=5 // pred_region
        %s310 = ssub.s32 %s11, 2
        // Predicated region
        $region37: #{simple_segmentation_model.5} parent=35 // pred_check
          %p311 = pneg %p128
        $region38: #{simple_segmentation_model.5} parent=35 // pred_check_branch
          %313 = sbr.rel (%p311) target = $region40
        $region39: #{simple_segmentation_model.5} parent=35 // pred_region
          %s314 = sand.u32 %s113, 1
          %s315 = scalar_lea.sflag [#allocation3], %s314
          %s316 = sand.u32 %s113, 1
          %s317 = smul.addr %s316, 16
          %s318 = scalar_lea.vmem [#allocation2], %s317
          %319 = dma.done %s315, 256
        $region40: #{simple_segmentation_model.5} parent=35 // pred_fallthru
          _
      $region36: #{simple_segmentation_model.5} parent=5 // pred_fallthru
        _
    $region6: #{simple_segmentation_model.5} parent=1 // loop_footer
      %s15 = sadd.s32 1, %s11
    $region7: #{simple_segmentation_model.5} parent=1 // loop_footer_branch
      %10 = sbr.rel target = $region3
    $region8: #{simple_segmentation_model.5} parent=1 // loop_exit
      _
    %320 = vsyncpa [#allocation3], 1
    %s321 = scalar_lea.sflag [#allocation3], 1
    %322 = vsyncpa %s321, 1

// kernel: simple_segmentation_model.4
$region0: #{simple_segmentation_model.4}
  #allocation0 [shape = 'u32[]', space=smem, size = 0x4, offset = 0x4, fixed_abs, tag = 'smem constant byte address 0x4 - core index']
  #allocation1 [shape = 'u32[144,128]{1,0:T(1,128)}', space=vmem, size = 0x12000, scoped, tag = 'internal scratch']
  %s0 = inlined_call_operand.vmem [shape: bf16[2,40,8], index: 0, kind: input, shape index: {}]
  %s1 = inlined_call_operand.vmem [shape: bf16[8,16], index: 1, kind: input, shape index: {}]
  %s2 = inlined_call_operand.vmem [shape: bf16[2,40,16], index: 2, kind: output, shape index: {}]
  %s3 = sld [smem:[#allocation0]]
  $region41: #{simple_segmentation_model.4} parent=0
    _
  %s5 = ssub.s32 1, %s3
  %s6 = scalar_select 0, %s5, %s3
  loop: start=0, step=1, limit=4
  $region2: #{simple_segmentation_model.4} parent=0 // loop_pre_header
    _
  $region3: #{simple_segmentation_model.4} parent=0 // loop_header
    %s8 = sphi 0, %s12
    %p9 = scmp.ge.s32.totalorder %s8, 4
    %s15 = sphi 0, %s34
    %s16 = sphi 0, %s30
    %s17 = sphi 0, %s26
    %s18 = sphi 0, %s15
    %s19 = sphi 0, %s16
    %s20 = sphi 0, %s17
    %s21 = sphi 0, %s18
    %s22 = sphi 0, %s19
    %s23 = sphi 0, %s20
    %s39 = sphi 0, %s41
    %s42 = sphi 0, %s39
    %s43 = sphi 0, %s42
    %s59 = sphi 0, %s43
    %s65 = sphi 0, %s67
    %s68 = sphi 0, %s65
    %s69 = sphi 0, %s68
    %s85 = sphi 0, %s69
    %s95 = sphi 0, %s97
    %s98 = sphi 0, %s95
    %s99 = sphi 0, %s98
    %s115 = sphi 0, %s99
  $region4: #{simple_segmentation_model.4} parent=0 // loop_header_branch
    %11 = sbr.rel (%p9) target = $region8
  $region5: #{simple_segmentation_model.4} parent=0 // loop_body
    %s13 = ssub.s32 %s8, 1
    %s14 = ssub.s32 %s8, 2
    %s24 = sadd.s32 1, %s17
    %p25 = scmp.ge.s32.totalorder %s24, 1
    %s26 = scalar_select %p25, 0, %s24
    %s27 = sadd.s32 1, %s16
    %s28 = scalar_select %p25, %s27, %s16
    %p29 = scmp.ge.s32.totalorder %s28, 1
    %s30 = scalar_select %p29, 0, %s28
    %s31 = sadd.s32 1, %s15
    %s32 = scalar_select %p29, %s31, %s15
    %p33 = scmp.ge.s32.totalorder %s32, 2
    %s34 = scalar_select %p33, 0, %s32
    %s35 = ssub.s32 %s15, %s34
    %s36 = ssub.s32 %s16, %s30
    %s37 = sor.u32 %s35, %s36
    %p38 = scmp.eq.s32.totalorder %s37, 0
    %s40 = sadd.s32 %s39, 1
    %s41 = scalar_select %p38, %s39, %s40
    %p44 = pneg %p38
    %p45 = scmp.eq.s32.totalorder %s8, 1
    %p46 = por %p44, %p45
    %p47 = scmp.ne.s32.totalorder %s39, %s42
    %p48 = scmp.eq.s32.totalorder %s8, 0
    %p49 = por %p47, %p48
    %p50 = scmp.ne.s32.totalorder %s39, %s42
    %p51 = scmp.eq.s32.totalorder %s13, 1
    %p52 = por %p50, %p51
    %p53 = scmp.ne.s32.totalorder %s42, %s43
    %p54 = scmp.eq.s32.totalorder %s13, 0
    %p55 = por %p53, %p54
    %p56 = scmp.ne.s32.totalorder %s42, %s43
    %p57 = scmp.eq.s32.totalorder %s14, 1
    %p58 = por %p56, %p57
    %p60 = scmp.ne.s32.totalorder %s43, %s59
    %p61 = scmp.eq.s32.totalorder %s14, 0
    %p62 = por %p60, %p61
    %s63 = ssub.s32 %s17, %s26
    %p64 = scmp.eq.s32.totalorder %s63, 0
    %s66 = sadd.s32 %s65, 1
    %s67 = scalar_select %p64, %s65, %s66
    %p70 = pneg %p64
    %p71 = scmp.eq.s32.totalorder %s8, 1
    %p72 = por %p70, %p71
    %p73 = scmp.ne.s32.totalorder %s65, %s68
    %p74 = scmp.eq.s32.totalorder %s8, 0
    %p75 = por %p73, %p74
    %p76 = scmp.ne.s32.totalorder %s65, %s68
    %p77 = scmp.eq.s32.totalorder %s13, 1
    %p78 = por %p76, %p77
    %p79 = scmp.ne.s32.totalorder %s68, %s69
    %p80 = scmp.eq.s32.totalorder %s13, 0
    %p81 = por %p79, %p80
    %p82 = scmp.ne.s32.totalorder %s68, %s69
    %p83 = scmp.eq.s32.totalorder %s14, 1
    %p84 = por %p82, %p83
    %p86 = scmp.ne.s32.totalorder %s69, %s85
    %p87 = scmp.eq.s32.totalorder %s14, 0
    %p88 = por %p86, %p87
    %s89 = ssub.s32 %s15, %s34
    %s90 = ssub.s32 %s16, %s30
    %s91 = sor.u32 %s89, %s90
    %s92 = ssub.s32 %s17, %s26
    %s93 = sor.u32 %s91, %s92
    %p94 = scmp.eq.s32.totalorder %s93, 0
    %s96 = sadd.s32 %s95, 1
    %s97 = scalar_select %p94, %s95, %s96
    %p100 = pneg %p94
    %p101 = scmp.eq.s32.totalorder %s8, 1
    %p102 = por %p100, %p101
    %p103 = scmp.ne.s32.totalorder %s95, %s98
    %p104 = scmp.eq.s32.totalorder %s8, 0
    %p105 = por %p103, %p104
    %p106 = scmp.ne.s32.totalorder %s95, %s98
    %p107 = scmp.eq.s32.totalorder %s13, 1
    %p108 = por %p106, %p107
    %p109 = scmp.ne.s32.totalorder %s98, %s99
    %p110 = scmp.eq.s32.totalorder %s13, 0
    %p111 = por %p109, %p110
    %p112 = scmp.ne.s32.totalorder %s98, %s99
    %p113 = scmp.eq.s32.totalorder %s14, 1
    %p114 = por %p112, %p113
    %p116 = scmp.ne.s32.totalorder %s99, %s115
    %p117 = scmp.eq.s32.totalorder %s14, 0
    %p118 = por %p116, %p117
    %p119 = scmp.le.s32.totalorder 1, %s8
    %p120 = scmp.lt.s32.totalorder %s8, 3
    %p121 = pnand %p119, %p120
    %p122 = pneg %p121
    // Predicated region
    $region9: #{simple_segmentation_model.4} parent=5 // pred_check
      _
    $region10: #{simple_segmentation_model.4} parent=5 // pred_check_branch
      %124 = sbr.rel (%p121) target = $region12
    $region11: #{simple_segmentation_model.4} parent=5 // pred_region
      %s125 = ssub.s32 %s8, 1
      // Predicated region
      $region13: #{simple_segmentation_model.4} parent=11 // pred_check
        %p126 = pneg %p81
      $region14: #{simple_segmentation_model.4} parent=11 // pred_check_branch
        %128 = sbr.rel (%p126) target = $region16
      $region15: #{simple_segmentation_model.4} parent=11 // pred_region
        %p129 = scmp.lt.s32.totalorder %s20, 0
        %s130 = scalar_select %p129, %s20, 0
        %s131 = smul.addr %s130, 4
        %s132 = scalar_lea.vmem %s1, %s131
      $region16: #{simple_segmentation_model.4} parent=11 // pred_fallthru
        _
    $region12: #{simple_segmentation_model.4} parent=5 // pred_fallthru
      _
    %p133 = scmp.lt.s32.totalorder %s8, 2
    // Predicated region
    $region17: #{simple_segmentation_model.4} parent=5 // pred_check
      %p134 = pneg %p133
    $region18: #{simple_segmentation_model.4} parent=5 // pred_check_branch
      %136 = sbr.rel (%p134) target = $region20
    $region19: #{simple_segmentation_model.4} parent=5 // pred_region
      // Predicated region
      $region21: #{simple_segmentation_model.4} parent=19 // pred_check
        %p137 = pneg %p49
      $region22: #{simple_segmentation_model.4} parent=19 // pred_check_branch
        %139 = sbr.rel (%p137) target = $region24
      $region23: #{simple_segmentation_model.4} parent=19 // pred_region
        %s140 = smul.u32 5, %s16
        %p141 = scmp.lt.s32.totalorder %s15, 1
        %s142 = scalar_select %p141, %s15, 1
        %p143 = scmp.lt.s32.totalorder %s140, 4
        %s144 = scalar_select %p143, %s140, 4
        %s145 = smul.addr %s142, 5
        %s146 = sadd.s32 %s144, %s145
        %s147 = smul.addr %s146, 4
        %s148 = scalar_lea.vmem %s0, %s147
        %s149 = smul.u32 5, %s16
      $region24: #{simple_segmentation_model.4} parent=19 // pred_fallthru
        _
    $region20: #{simple_segmentation_model.4} parent=5 // pred_fallthru
      _
    %p150 = scmp.le.s32.totalorder 1, %s8
    %p151 = scmp.lt.s32.totalorder %s8, 3
    %p152 = pnand %p150, %p151
    %p153 = pneg %p152
    // Predicated region
    $region25: #{simple_segmentation_model.4} parent=5 // pred_check
      _
    $region26: #{simple_segmentation_model.4} parent=5 // pred_check_branch
      %155 = sbr.rel (%p152) target = $region28
    $region27: #{simple_segmentation_model.4} parent=5 // pred_region
      %s156 = ssub.s32 %s8, 1
      %s157 = smul.u32 5, %s19
      %p158 = scmp.lt.s32.totalorder %s18, 1
      %s159 = scalar_select %p158, %s18, 1
      %p160 = scmp.lt.s32.totalorder %s157, 4
      %s161 = scalar_select %p160, %s157, 4
      %s162 = smul.addr %s159, 5
      %s163 = sadd.s32 %s161, %s162
      %s164 = smul.addr %s163, 4
      %s165 = scalar_lea.vmem %s0, %s164
      %p166 = pneg %p55
      %p167 = pneg %p52
      %p168 = scmp.lt.s32.totalorder %s20, 0
      %s169 = scalar_select %p168, %s20, 0
      %s170 = smul.addr %s169, 4
      %s171 = scalar_lea.vmem %s1, %s170
      %p172 = pneg %p81
      %p173 = pneg %p78
      %p174 = pneg %p111
      %p175 = pneg %p108
      %s176 = smul.u32 5, %s19
      %p177 = scmp.lt.s32.totalorder %s18, 1
      %s178 = scalar_select %p177, %s18, 1
      %p179 = scmp.lt.s32.totalorder %s176, 4
      %s180 = scalar_select %p179, %s176, 4
      %p181 = scmp.lt.s32.totalorder %s20, 0
      %s182 = scalar_select %p181, %s20, 0
      %s183 = sadd.s32 %s182, %s180
      %s184 = smul.addr %s178, 5
      %s185 = sadd.s32 %s183, %s184
      %s186 = smul.addr %s185, 4
      %s187 = scalar_lea.vmem %s2, %s186
      %s188 = smul.u32 5, %s19
      %p189 = scmp.lt.s32.totalorder %s18, 1
      %s190 = scalar_select %p189, %s18, 1
      %p191 = scmp.lt.s32.totalorder %s188, 4
      %s192 = scalar_select %p191, %s188, 4
      %s193 = smul.addr %s190, 5
      %s194 = sadd.s32 %s192, %s193
      %s195 = smul.addr %s194, 4
      %s196 = scalar_lea.vmem %s0, %s195
      %s197 = smul.u32 5, %s19
      %p198 = scmp.lt.s32.totalorder %s20, 0
      %s199 = scalar_select %p198, %s20, 0
      %s200 = smul.addr %s199, 4
      %s201 = scalar_lea.vmem %s1, %s200
      %s202 = smul.u32 5, %s19
      %p203 = scmp.lt.s32.totalorder %s18, 1
      %s204 = scalar_select %p203, %s18, 1
      %p205 = scmp.lt.s32.totalorder %s202, 4
      %s206 = scalar_select %p205, %s202, 4
      %p207 = scmp.lt.s32.totalorder %s20, 0
      %s208 = scalar_select %p207, %s20, 0
      %s209 = sadd.s32 %s208, %s206
      %s210 = smul.addr %s204, 5
      %s211 = sadd.s32 %s209, %s210
      %s212 = smul.addr %s211, 4
      %s213 = scalar_lea.vmem %s2, %s212
      %s214 = smul.u32 5, %s19
      %v216 = vld [vmem:[%s196] sm:$0xf]
      %v217 = vld [vmem:[%s196 + $0x4] sm:$0xf]
      %v218 = vld [vmem:[%s196 + $0x8] sm:$0xf]
      %v219 = vld [vmem:[%s196 + $0xc] sm:$0xf]
      %v220 = vld [vmem:[%s196 + $0x10] sm:$0xf]
      %v221 = vld [vmem:[%s201] sm:$0xf]
      %v227 = vunpack.c.l.b16 %v216
      %v228 = vunpack.c.l.b16 %v217
      %v229 = vunpack.c.l.b16 %v218
      %v230 = vunpack.c.l.b16 %v219
      %v231 = vunpack.c.l.b16 %v220
      %v232 = vpack.c.b16 %v228, %v227
      %v233 = vpack.c.b16 %v230, %v229
      %v234 = vpack.c.b16 %v231, %v231
      %vm235 = vcmask 64512
      %v237 = vsel %vm235, %v232, 0
      %v240 = vsel %vm235, %v233, 0
      %v243 = vsel %vm235, %v234, 0
      %vm245 = vcmask 1043456
      %v247 = vsel %vm245, %v221, 0
      %249 = vmatprep.subr.bf16.mxu0 0
      %250 = vmatpush1.bf16.msra.mxu0 0
      %251 = vmatprep.subr.bf16.mxu0 0
      %252 = vmatpush1.bf16.msra.mxu0 0
      %253 = vmatprep.subr.bf16.mxu0 0
      %254 = vmatpush1.bf16.msra.mxu0 0
      %255 = vmatprep.subr.bf16.mxu0 0
      %256 = vmatpush1.bf16.msra.mxu0 0
      %257 = vmatprep.subr.bf16.mxu0 0
      %258 = vmatpush1.bf16.msra.mxu0 0
      %259 = vmatprep.subr.bf16.mxu0 0
      %260 = vmatpush1.bf16.msra.mxu0 0
      %261 = vmatprep.subr.bf16.mxu0 0
      %262 = vmatpush1.bf16.msra.mxu0 0
      %263 = vmatprep.subr.bf16.mxu0 0
      %264 = vmatpush1.bf16.msra.mxu0 %v247
      %265 = vmatprep.subr.bf16.mxu0 0
      %266 = vmatpush2.bf16.msra.mxu0 0
      %267 = vmatprep.subr.bf16.mxu0 0
      %268 = vmatpush2.bf16.msra.mxu0 0
      %269 = vmatprep.subr.bf16.mxu0 0
      %270 = vmatpush2.bf16.msra.mxu0 0
      %271 = vmatprep.subr.bf16.mxu0 0
      %272 = vmatpush2.bf16.msra.mxu0 0
      %273 = vmatprep.subr.bf16.mxu0 0
      %274 = vmatpush2.bf16.msra.mxu0 0
      %275 = vmatprep.subr.bf16.mxu0 0
      %276 = vmatpush2.bf16.msra.mxu0 0
      %277 = vmatprep.subr.bf16.mxu0 0
      %278 = vmatpush2.bf16.msra.mxu0 0
      %279 = vmatprep.subr.bf16.mxu0 0
      %280 = vmatpush2.bf16.msra.mxu0 0
      %281 = vmatprep.mubr.bf16.mxu0 0
      %282 = vmatmul.mubr.bf16.gmra.mxu0 %v237
      %v283 = vpop.f32.mrf.mxu0
      %v284 = vadd.f32 0.0, %v283
      %v285 = vpop.f32.mrf.mxu0
      %v286 = vpop.f32.mrf.mxu0
      %v287 = vadd.f32 0.0, %v286
      %v288 = vpop.f32.mrf.mxu0
      %289 = vmatprep.mubr.bf16.mxu0 0
      %290 = vmatmul.mubr.bf16.gmra.mxu0 %v240
      %v291 = vpop.f32.mrf.mxu0
      %v292 = vadd.f32 0.0, %v291
      %v293 = vpop.f32.mrf.mxu0
      %v294 = vpop.f32.mrf.mxu0
      %v295 = vadd.f32 0.0, %v294
      %v296 = vpop.f32.mrf.mxu0
      %297 = vmatprep.mubr.bf16.mxu0 0
      %298 = vmatmul.mubr.bf16.gmra.mxu0 %v243
      %v299 = vpop.f32.mrf.mxu0
      %v300 = vadd.f32 0.0, %v299
      %v301 = vpop.f32.mrf.mxu0
      %v302 = vpop.f32.mrf.mxu0
      %v303 = vpop.f32.mrf.mxu0
      %304 = vdwg.mxu0
      %v305 = vpack.c.bf16 %v287, %v284
      %v306 = vpack.c.bf16 %v295, %v292
      %v307 = vpack.c.bf16 %v300, %v300
      %v311 = vunpack.c.l.b16 %v305
      %v312 = vunpack.c.h.b16 %v305
      %v313 = vunpack.c.l.b16 %v306
      %v314 = vunpack.c.h.b16 %v306
      %v315 = vunpack.c.l.b16 %v307
      %v316 = vpack.c.b16 %v311, %v311
      %v317 = vpack.c.b16 %v312, %v312
      %v318 = vpack.c.b16 %v313, %v313
      %v319 = vpack.c.b16 %v314, %v314
      %v320 = vpack.c.b16 %v315, %v315
      %vm326 = vcmask 125952
      %327 = vst.msk [vmem:[%s213] sm:$0xf] %vm326, %v316
      %328 = vst.msk [vmem:[%s213 + $0x4] sm:$0xf] %vm326, %v317
      %329 = vst.msk [vmem:[%s213 + $0x8] sm:$0xf] %vm326, %v318
      %330 = vst.msk [vmem:[%s213 + $0xc] sm:$0xf] %vm326, %v319
      %331 = vst.msk [vmem:[%s213 + $0x10] sm:$0xf] %vm326, %v320
      %s332 = smul.u32 5, %s19
      %p333 = scmp.lt.s32.totalorder %s18, 1
      %s334 = scalar_select %p333, %s18, 1
      %p335 = scmp.lt.s32.totalorder %s332, 4
      %s336 = scalar_select %p335, %s332, 4
      %p337 = scmp.lt.s32.totalorder %s20, 0
      %s338 = scalar_select %p337, %s20, 0
      %s339 = sadd.s32 %s338, %s336
      %s340 = smul.addr %s334, 5
      %s341 = sadd.s32 %s339, %s340
      %s342 = smul.addr %s341, 4
      %s343 = scalar_lea.vmem %s2, %s342
      // Predicated region
      $region29: #{simple_segmentation_model.4} parent=27 // pred_check
        %p344 = pneg %p108
      $region30: #{simple_segmentation_model.4} parent=27 // pred_check_branch
        %346 = sbr.rel (%p344) target = $region32
      $region31: #{simple_segmentation_model.4} parent=27 // pred_region
        %s347 = smul.u32 5, %s19
      $region32: #{simple_segmentation_model.4} parent=27 // pred_fallthru
        _
    $region28: #{simple_segmentation_model.4} parent=5 // pred_fallthru
      _
    %p348 = scmp.le.s32.totalorder 2, %s8
    // Predicated region
    $region33: #{simple_segmentation_model.4} parent=5 // pred_check
      %p349 = pneg %p348
    $region34: #{simple_segmentation_model.4} parent=5 // pred_check_branch
      %351 = sbr.rel (%p349) target = $region36
    $region35: #{simple_segmentation_model.4} parent=5 // pred_region
      %s352 = ssub.s32 %s8, 2
      // Predicated region
      $region37: #{simple_segmentation_model.4} parent=35 // pred_check
        %p353 = pneg %p114
      $region38: #{simple_segmentation_model.4} parent=35 // pred_check_branch
        %355 = sbr.rel (%p353) target = $region40
      $region39: #{simple_segmentation_model.4} parent=35 // pred_region
        %s356 = smul.u32 5, %s22
        %p357 = scmp.lt.s32.totalorder %s21, 1
        %s358 = scalar_select %p357, %s21, 1
        %p359 = scmp.lt.s32.totalorder %s356, 4
        %s360 = scalar_select %p359, %s356, 4
        %p361 = scmp.lt.s32.totalorder %s23, 0
        %s362 = scalar_select %p361, %s23, 0
        %s363 = sadd.s32 %s362, %s360
        %s364 = smul.addr %s358, 5
        %s365 = sadd.s32 %s363, %s364
        %s366 = smul.addr %s365, 4
        %s367 = scalar_lea.vmem %s2, %s366
      $region40: #{simple_segmentation_model.4} parent=35 // pred_fallthru
        _
    $region36: #{simple_segmentation_model.4} parent=5 // pred_fallthru
      _
  $region6: #{simple_segmentation_model.4} parent=0 // loop_footer
    %s12 = sadd.s32 1, %s8
  $region7: #{simple_segmentation_model.4} parent=0 // loop_footer_branch
    %7 = sbr.rel target = $region3
  $region8: #{simple_segmentation_model.4} parent=0 // loop_exit
    _

</llo_original>
